<compile_context>
chip_gen: v7x
topology: tpu7x:2x2x1
jax: 0.10.0
libtpu: 0.0.40
codegen_flags: <defaults>
</compile_context>

<pallas_src>
import functools
import math

import jax
import jax.numpy as jnp
from jax import lax
from jax.experimental import pallas as pl
from jax.experimental.pallas import tpu as pltpu


_NEG_LARGE = -1e30  # large-but-finite mask fill (finfo.min addition can overflow to -inf)


# ---------------------------------------------------------------------------
# Tiling helpers
# ---------------------------------------------------------------------------
def _pick_tile(dim, target, align=128):
    """Largest divisor of `dim` that is <= target, preferring `align`-aligned, then
    8-aligned, then any divisor.  Returns `dim` itself when dim <= target."""
    if dim <= target:
        return dim
    divs = [t for t in range(target, 0, -1) if dim % t == 0]
    for req in (align, 8, 1):
        for t in divs:
            if t % req == 0:
                return t
    return dim


def _vmem_capacity_bytes():
    """Physical per-core VMEM if queryable, else a conservative (v7x) 64 MiB."""
    try:
        info = pltpu.get_tpu_info()
        cap = int(getattr(info, "vmem_capacity_bytes", 0))
        if cap > 0:
            return cap
    except Exception:
        pass
    return 64 * 1024 * 1024


def _mha_vmem_bytes(tq, S, D, H, Hm, attn_bytes):
    """Rough per-grid-step VMEM need for the attention kernel (double-buffered I/O)."""
    bf16 = 2
    q_in = 2 * tq * D * bf16
    kv_in = 2 * 2 * S * D * bf16
    mask_in = 2 * Hm * tq * S * 4
    ctx_out = 2 * tq * D * bf16
    attn_out = 2 * H * tq * S * attn_bytes
    ctx_scr = tq * D * 4
    work = 6 * tq * S * 4            # scores / exp / where intermediates (per head)
    return q_in + kv_in + mask_in + ctx_out + attn_out + ctx_scr + work


def _pick_tq(qS, S, D, H, Hm, attn_bytes, budget, tq_target=128):
    """Largest q-tile <= tq_target (128-aligned preferred) whose working set fits."""
    start = min(qS, tq_target)
    divs = [t for t in range(start, 0, -1) if qS % t == 0]
    cands = ([t for t in divs if t % 128 == 0]
             + [t for t in divs if t % 8 == 0 and t % 128 != 0]
             + [t for t in divs if t % 8 != 0])
    for t in cands:
        if _mha_vmem_bytes(t, S, D, H, Hm, attn_bytes) <= budget:
            return t
    return cands[-1]


# ---------------------------------------------------------------------------
# Kernel 1: tiled dense layer   y = x @ W^T + b      (W in PyTorch [Dout, Din] layout)
# ---------------------------------------------------------------------------
def _linear_kernel(x_ref, w_ref, b_ref, o_ref, acc_ref):
    @pl.when(pl.program_id(2) == 0)
    def _():
        acc_ref[...] = jnp.zeros_like(acc_ref)

    # x/w arrive pre-cast to bf16; contract Din of x with Din of W (no transpose).
    acc_ref[...] += lax.dot_general(
        x_ref[...], w_ref[...],
        dimension_numbers=(((1,), (1,)), ((), ())),
        preferred_element_type=jnp.float32,
    )

    @pl.when(pl.program_id(2) == pl.num_programs(2) - 1)
    def _():
        o_ref[...] = (acc_ref[...] + b_ref[...]).astype(o_ref.dtype)


def linear(x2d, w, b, out_dtype=jnp.float32, tm=256, tn=256, tk=512):
    """x2d: [M, Din], w: [Dout, Din] (PyTorch layout), b: [Dout] -> [M, Dout]."""
    x2d = x2d.astype(jnp.bfloat16)            # pre-cast once (halves HBM->VMEM bytes)
    w = w.astype(jnp.bfloat16)
    b = b.astype(jnp.float32)
    M, Din = x2d.shape
    Dout = w.shape[0]
    tm = _pick_tile(M, tm, align=8)
    tn = _pick_tile(Dout, tn, align=128)
    tk = _pick_tile(Din, tk, align=128)
    grid = (M // tm, Dout // tn, Din // tk)
    out_bytes = jnp.dtype(out_dtype).itemsize
    cost = pl.CostEstimate(
        flops=2 * M * Dout * Din, transcendentals=0,
        bytes_accessed=2 * M * Din + 2 * Dout * Din + 4 * Dout + out_bytes * M * Dout)
    return pl.pallas_call(
        _linear_kernel,
        out_shape=jax.ShapeDtypeStruct((M, Dout), out_dtype),
        grid=grid,
        in_specs=[
            pl.BlockSpec((tm, tk), lambda i, j, k: (i, k)),
            pl.BlockSpec((tn, tk), lambda i, j, k: (j, k)),
            pl.BlockSpec((1, tn), lambda i, j, k: (0, j)),
        ],
        out_specs=pl.BlockSpec((tm, tn), lambda i, j, k: (i, j)),
        scratch_shapes=[pltpu.VMEM((tm, tn), jnp.float32)],
        compiler_params=pltpu.CompilerParams(
            dimension_semantics=("parallel", "parallel", "arbitrary")),
        cost_estimate=cost,
    )(x2d, w, b.reshape(1, Dout))


# ---------------------------------------------------------------------------
# Kernel 2: fused Q/K/V projection (x tile read once, three matmuls, three outputs)
# ---------------------------------------------------------------------------
def _qkv_kernel(x_ref, wq_ref, wk_ref, wv_ref, bq_ref, bk_ref, bv_ref,
                qo_ref, ko_ref, vo_ref, qacc, kacc, vacc):
    @pl.when(pl.program_id(2) == 0)
    def _():
        qacc[...] = jnp.zeros_like(qacc)
        kacc[...] = jnp.zeros_like(kacc)
        vacc[...] = jnp.zeros_like(vacc)

    x = x_ref[...]                              # bf16, read once per step
    dn = (((1,), (1,)), ((), ()))
    qacc[...] += lax.dot_general(x, wq_ref[...], dn, preferred_element_type=jnp.float32)
    kacc[...] += lax.dot_general(x, wk_ref[...], dn, preferred_element_type=jnp.float32)
    vacc[...] += lax.dot_general(x, wv_ref[...], dn, preferred_element_type=jnp.float32)

    @pl.when(pl.program_id(2) == pl.num_programs(2) - 1)
    def _():
        qo_ref[...] = (qacc[...] + bq_ref[...]).astype(qo_ref.dtype)
        ko_ref[...] = (kacc[...] + bk_ref[...]).astype(ko_ref.dtype)
        vo_ref[...] = (vacc[...] + bv_ref[...]).astype(vo_ref.dtype)


def qkv_projection(x2d, wq, bq, wk, bk, wv, bv, out_dtype=jnp.bfloat16,
                   tm=256, tn=256, tk=512):
    x2d = x2d.astype(jnp.bfloat16)
    wq, wk, wv = (w.astype(jnp.bfloat16) for w in (wq, wk, wv))
    bq, bk, bv = (b.astype(jnp.float32) for b in (bq, bk, bv))
    M, Din = x2d.shape
    Dout = wq.shape[0]
    tm = _pick_tile(M, tm, align=8)
    tn = _pick_tile(Dout, tn, align=128)
    tk = _pick_tile(Din, tk, align=128)
    grid = (M // tm, Dout // tn, Din // tk)
    w_spec = pl.BlockSpec((tn, tk), lambda i, j, k: (j, k))
    b_spec = pl.BlockSpec((1, tn), lambda i, j, k: (0, j))
    o_spec = pl.BlockSpec((tm, tn), lambda i, j, k: (i, j))
    cost = pl.CostEstimate(
        flops=6 * M * Dout * Din, transcendentals=0,
        bytes_accessed=2 * M * Din + 3 * 2 * Dout * Din + 3 * 4 * Dout + 3 * 2 * M * Dout)
    out_sd = jax.ShapeDtypeStruct((M, Dout), out_dtype)
    return pl.pallas_call(
        _qkv_kernel,
        out_shape=(out_sd, out_sd, out_sd),
        grid=grid,
        in_specs=[pl.BlockSpec((tm, tk), lambda i, j, k: (i, k)),
                  w_spec, w_spec, w_spec, b_spec, b_spec, b_spec],
        out_specs=(o_spec, o_spec, o_spec),
        scratch_shapes=[pltpu.VMEM((tm, tn), jnp.float32)] * 3,
        compiler_params=pltpu.CompilerParams(
            dimension_semantics=("parallel", "parallel", "arbitrary")),
        cost_estimate=cost,
    )(x2d, wq, wk, wv, bq.reshape(1, Dout), bk.reshape(1, Dout), bv.reshape(1, Dout))


# ---------------------------------------------------------------------------
# Kernel 3: attention — per (batch, q-tile), all heads folded in the feature dim
# ---------------------------------------------------------------------------
def _mha_kernel(mask_ref, q_ref, k_ref, v_ref, o_ref, a_ref, ctx_ref, *,
                num_heads, d_k, scale, mask_heads):
    # hoist 1/sqrt(d_k): one (tq, D) multiply instead of H x (tq, S) multiplies
    q_all = (q_ref[...].astype(jnp.float32) * scale).astype(jnp.bfloat16)  # (tq, D)
    k_all = k_ref[...]                      # (S, D) bf16
    v_all = v_ref[...]                      # (S, D) bf16
    mask = mask_ref[...]                    # (mask_heads, tq, S); mask_heads in {1, H}

    dn = (((1,), (1,)), ((), ()))           # contract the d_k axis of both operands
    for h in range(num_heads):              # static unroll over heads
        lo, hi = h * d_k, (h + 1) * d_k
        qh, kh, vh = q_all[:, lo:hi], k_all[:, lo:hi], v_all[:, lo:hi]

        # scores = (q*scale) @ k^T    (no in-kernel k.T — dot_general handles it)
        scores = lax.dot_general(qh, kh, dn, preferred_element_type=jnp.float32)
        m_h = mask[h] if mask_heads == num_heads else mask[0]
        scores = jnp.where(m_h > 0.0, scores, _NEG_LARGE)

        # exact softmax in f32 (returned weights must sum to 1)
        s_max = jnp.max(scores, axis=-1, keepdims=True)
        e = jnp.exp(scores - s_max)
        denom = jnp.sum(e, axis=-1, keepdims=True)
        w = e / denom

        a_ref[h] = w.astype(a_ref.dtype)
        # per-head context goes into the f32 VMEM scratch (no concat, no live H ctxs)
        ctx_ref[:, lo:hi] = jnp.dot(w.astype(jnp.bfloat16), vh,
                                    preferred_element_type=jnp.float32)

    # single lane-dense store of the full (tq, D) context
    o_ref[...] = ctx_ref[...].astype(o_ref.dtype)


def mha_attention(q, k, v, mask4, num_heads, tq_target=128,
                  attn_weights_dtype=jnp.float32):
    """q: [B,qS,D], k/v: [B,S,D] (heads folded in D), mask4: [Bm,Hm,qS,S], Bm∈{1,B}, Hm∈{1,H}."""
    q = q.astype(jnp.bfloat16)
    k = k.astype(jnp.bfloat16)
    v = v.astype(jnp.bfloat16)
    B, qS, D = q.shape
    S = k.shape[1]
    d_k = D // num_heads
    Bm, Hm = mask4.shape[0], mask4.shape[1]
    assert Bm in (1, B) and Hm in (1, num_heads)

    attn_bytes = jnp.dtype(attn_weights_dtype).itemsize
    # per-generation VMEM budget: 0.75 x physical (v7x ~48 MiB, v5e/v6e ~96 MiB)
    vmem_limit = max(int(_vmem_capacity_bytes() * 0.75), 16 * 1024 * 1024)
    tq = _pick_tq(qS, S, D, num_heads, Hm, attn_bytes,
                  budget=int(vmem_limit * 0.85), tq_target=tq_target)
    grid = (B, qS // tq)
    kernel = functools.partial(_mha_kernel, num_heads=num_heads, d_k=d_k,
                               scale=1.0 / math.sqrt(d_k), mask_heads=Hm)

    def mask_map(b, i):                      # broadcast mask over (B, H) via index_map
        return (b if Bm > 1 else 0, 0, i, 0)

    cost = pl.CostEstimate(
        flops=4 * B * qS * S * D,
        transcendentals=B * num_heads * qS * S,
        bytes_accessed=(2 * B * qS * D + 2 * 2 * B * S * D + 4 * Bm * Hm * qS * S
                        + attn_bytes * B * num_heads * qS * S + 2 * B * qS * D))

    out, attn = pl.pallas_call(
        kernel,
        out_shape=(
            jax.ShapeDtypeStruct((B, qS, D), jnp.bfloat16),                  # context
            jax.ShapeDtypeStruct((B, num_heads, qS, S), attn_weights_dtype),  # weights
        ),
        grid=grid,
        in_specs=[
            pl.BlockSpec((None, Hm, tq, S), mask_map),
            pl.BlockSpec((None, tq, D), lambda b, i: (b, i, 0)),
            pl.BlockSpec((None, S, D), lambda b, i: (b, 0, 0)),
            pl.BlockSpec((None, S, D), lambda b, i: (b, 0, 0)),
        ],
        out_specs=(
            pl.BlockSpec((None, tq, D), lambda b, i: (b, i, 0)),
            pl.BlockSpec((None, num_heads, tq, S), lambda b, i: (b, 0, i, 0)),
        ),
        scratch_shapes=[pltpu.VMEM((tq, D), jnp.float32)],
        compiler_params=pltpu.CompilerParams(
            dimension_semantics=("parallel", "parallel"),
            vmem_limit_bytes=vmem_limit),
        cost_estimate=cost,
    )(mask4, q, k, v)
    return out, attn


# ---------------------------------------------------------------------------
# Module wrapper (parameter container + forward)
# ---------------------------------------------------------------------------
def init_attention_params(key, d_model):
    """Deterministic synthetic parameters (PyTorch-Linear-like uniform init)."""
    bound = 1.0 / math.sqrt(d_model)
    ks = jax.random.split(key, 8)

    def u(k, shape):
        return jax.random.uniform(k, shape, jnp.float32, -bound, bound)

    return {
        "wq_w": u(ks[0], (d_model, d_model)), "wq_b": u(ks[1], (d_model,)),
        "wk_w": u(ks[2], (d_model, d_model)), "wk_b": u(ks[3], (d_model,)),
        "wv_w": u(ks[4], (d_model, d_model)), "wv_b": u(ks[5], (d_model,)),
        "wo_w": u(ks[6], (d_model, d_model)), "wo_b": u(ks[7], (d_model,)),
    }


def attention_forward(params, query, key, value, mask, num_heads,
                      attn_weights_dtype=jnp.float32):
    """query/key/value: [B, S, d_model]; mask: None, [qS,S], [B,qS,S] or [B,H,qS,S].

    Set attn_weights_dtype=jnp.bfloat16 to halve the dominant HBM store / VMEM block
    of the returned attention weights (default f32 matches the PyTorch reference)."""
    B, qS, d_model = query.shape
    S = key.shape[1]
    assert d_model % num_heads == 0

    # --- Q/K/V projections ---
    if (query is key) and (key is value):
        # self-attention: one fused pallas_call, x read from HBM once
        x2d = query.reshape(B * qS, d_model)
        q2d, k2d, v2d = qkv_projection(
            x2d,
            params["wq_w"], params["wq_b"],
            params["wk_w"], params["wk_b"],
            params["wv_w"], params["wv_b"],
            out_dtype=jnp.bfloat16)
        kS = qS
    else:
        q2d = linear(query.reshape(B * qS, d_model), params["wq_w"], params["wq_b"],
                     out_dtype=jnp.bfloat16)
        k2d = linear(key.reshape(B * S, d_model), params["wk_w"], params["wk_b"],
                     out_dtype=jnp.bfloat16)
        v2d = linear(value.reshape(B * S, d_model), params["wv_w"], params["wv_b"],
                     out_dtype=jnp.bfloat16)
        kS = S

    # heads stay folded in the feature dim — no split/merge transposes through HBM
    q3 = q2d.reshape(B, qS, d_model)
    k3 = k2d.reshape(B, kS, d_model)
    v3 = v2d.reshape(B, kS, d_model)

    # normalize mask to [Bm, Hm, qS, S] WITHOUT materializing the (B, H) broadcast
    if mask is None:
        mask4 = jnp.ones((1, 1, qS, kS), jnp.float32)
    elif mask.ndim == 2:
        mask4 = mask.reshape(1, 1, qS, kS).astype(jnp.float32)
    elif mask.ndim == 3:
        mask4 = mask.reshape(mask.shape[0], 1, qS, kS).astype(jnp.float32)
    else:
        mask4 = mask.astype(jnp.float32)

    # --- attention hot path (Pallas) ---
    context, attn_weights = mha_attention(q3, k3, v3, mask4, num_heads,
                                          attn_weights_dtype=attn_weights_dtype)
    # TODO(synk): dropout on the attention weights is identity (inference/eval mode).

    # --- output projection (context already in [B, qS, d_model] layout) ---
    out = linear(context.reshape(B * qS, d_model), params["wo_w"], params["wo_b"],
                 out_dtype=jnp.float32)
    return out.reshape(B, qS, d_model), attn_weights


# ---------------------------------------------------------------------------
# Pure-JAX reference with the SAME bf16-MXU-input numerics (documents intended math)
# ---------------------------------------------------------------------------
def _reference_forward(params, query, key_, value, mask2d, num_heads):
    B, qS, D = query.shape
    S = key_.shape[1]
    d_k = D // num_heads

    def lin_bf16(x, w, b):
        y = jnp.dot(x.astype(jnp.bfloat16), w.astype(jnp.bfloat16).T,
                    preferred_element_type=jnp.float32) + b
        return y.astype(jnp.bfloat16)

    q = lin_bf16(query.reshape(B * qS, D), params["wq_w"], params["wq_b"]).reshape(B, qS, D)
    k = lin_bf16(key_.reshape(B * S, D), params["wk_w"], params["wk_b"]).reshape(B, S, D)
    v = lin_bf16(value.reshape(B * S, D), params["wv_w"], params["wv_b"]).reshape(B, S, D)

    scale = 1.0 / math.sqrt(d_k)
    q = (q.astype(jnp.float32) * scale).astype(jnp.bfloat16)

    qh = q.reshape(B, qS, num_heads, d_k).transpose(0, 2, 1, 3)
    kh = k.reshape(B, S, num_heads, d_k).transpose(0, 2, 1, 3)
    vh = v.reshape(B, S, num_heads, d_k).transpose(0, 2, 1, 3)

    scores = jnp.einsum("bhqd,bhkd->bhqk", qh, kh, preferred_element_type=jnp.float32)
    scores = jnp.where(mask2d.reshape(1, 1, qS, S) > 0.0, scores, _NEG_LARGE)
    scores = scores - jnp.max(scores, axis=-1, keepdims=True)
    e = jnp.exp(scores)
    attn = e / jnp.sum(e, axis=-1, keepdims=True)

    ctx = jnp.einsum("bhqk,bhkd->bhqd", attn.astype(jnp.bfloat16), vh,
                     preferred_element_type=jnp.float32)
    ctx = ctx.transpose(0, 2, 1, 3).reshape(B * qS, D).astype(jnp.bfloat16)
    out = jnp.dot(ctx, params["wo_w"].astype(jnp.bfloat16).T,
                  preferred_element_type=jnp.float32) + params["wo_b"]
    return out.astype(jnp.float32).reshape(B, qS, D), attn


# ---------------------------------------------------------------------------
if __name__ == "__main__":
    B, S, d_model, num_heads = 2, 8, 32, 4

    root = jax.random.PRNGKey(0)
    kp, kx = jax.random.split(root, 2)
    params = init_attention_params(kp, d_model)

    x = jax.random.normal(kx, (B, S, d_model), jnp.float32)

    # causal mask: a single [S, S] array; broadcast over (B, H) by the kernel index_map
    causal = jnp.tril(jnp.ones((S, S), jnp.float32))

    out, attn = attention_forward(params, x, x, x, causal, num_heads)
    jax.block_until_ready((out, attn))

    assert out.shape == (B, S, d_model)
    assert attn.shape == (B, num_heads, S, S)
    # exact softmax: rows sum to 1 within f32 rounding
    assert bool(jnp.allclose(jnp.sum(attn, axis=-1), 1.0, atol=1e-3))
    # causal masking: strictly-upper-triangular weights are (numerically) zero
    assert bool(jnp.max(jnp.abs(attn * (1.0 - causal))) < 1e-6)

    # numerics-matched pure-JAX reference (same bf16 MXU inputs, f32 accumulation)
    ref_out, ref_attn = _reference_forward(params, x, x, x, causal, num_heads)
    jax.block_until_ready((ref_out, ref_attn))
    assert bool(jnp.allclose(attn, ref_attn, atol=2e-3, rtol=2e-2))
    assert bool(jnp.allclose(out, ref_out, atol=5e-3, rtol=5e-2))

    # optional low-HBM attention-weights path (bf16 weights output) also runs
    out_b, attn_b = attention_forward(params, x, x, x, causal, num_heads,
                                      attn_weights_dtype=jnp.bfloat16)
    jax.block_until_ready((out_b, attn_b))
    assert attn_b.dtype == jnp.bfloat16
    assert bool(jnp.allclose(jnp.sum(attn_b.astype(jnp.float32), axis=-1), 1.0, atol=3e-2))

    print("KERNEL_OK")
</pallas_src>

<mosaic_0001>
module attributes {stable_mosaic.version = 11 : i64} {
  func.func @_qkv_kernel(%arg0: i32, %arg1: i32, %arg2: i32, %arg3: memref<16x32xbf16, #tpu.memory_space<vmem>>, %arg4: memref<32x32xbf16, #tpu.memory_space<vmem>>, %arg5: memref<32x32xbf16, #tpu.memory_space<vmem>>, %arg6: memref<32x32xbf16, #tpu.memory_space<vmem>>, %arg7: memref<1x32xf32, #tpu.memory_space<vmem>>, %arg8: memref<1x32xf32, #tpu.memory_space<vmem>>, %arg9: memref<1x32xf32, #tpu.memory_space<vmem>>, %arg10: memref<16x32xbf16, #tpu.memory_space<vmem>>, %arg11: memref<16x32xbf16, #tpu.memory_space<vmem>>, %arg12: memref<16x32xbf16, #tpu.memory_space<vmem>>, %arg13: memref<16x32xf32, #tpu.memory_space<vmem>>, %arg14: memref<16x32xf32, #tpu.memory_space<vmem>>, %arg15: memref<16x32xf32, #tpu.memory_space<vmem>>) attributes {dimension_semantics = [#tpu.dimension_semantics<parallel>, #tpu.dimension_semantics<parallel>, #tpu.dimension_semantics<arbitrary>], iteration_bounds = array<i64: 1, 1, 1>, scalar_prefetch = 0 : i64, scratch_operands = 3 : i64, tpu.core_type = #tpu.core_type<tc>, window_params = [{transform_indices = @transform_0, window_bounds = array<i64: 16, 32>}, {transform_indices = @transform_1, window_bounds = array<i64: 32, 32>}, {transform_indices = @transform_2, window_bounds = array<i64: 32, 32>}, {transform_indices = @transform_3, window_bounds = array<i64: 32, 32>}, {transform_indices = @transform_4, window_bounds = array<i64: 1, 32>}, {transform_indices = @transform_5, window_bounds = array<i64: 1, 32>}, {transform_indices = @transform_6, window_bounds = array<i64: 1, 32>}, {transform_indices = @transform_7, window_bounds = array<i64: 16, 32>}, {transform_indices = @transform_8, window_bounds = array<i64: 16, 32>}, {transform_indices = @transform_9, window_bounds = array<i64: 16, 32>}]} {
    %c0_i32 = arith.constant 0 : i32
    %0 = arith.cmpi eq, %arg2, %c0_i32 : i32
    %1 = arith.extui %0 : i1 to i32
    %c0_i32_0 = arith.constant 0 : i32
    %2 = arith.cmpi ne, %1, %c0_i32_0 : i32
    scf.if %2 {
      %cst_24 = arith.constant 0.000000e+00 : f32
      %22 = vector.broadcast %cst_24 : f32 to vector<16x32xf32>
      %c0_25 = arith.constant 0 : index
      %c0_26 = arith.constant 0 : index
      %23 = vector.load %arg13[%c0_25, %c0_26] : memref<16x32xf32, #tpu.memory_space<vmem>>, vector<16x32xf32>
      tpu.vector_store %arg13[%c0_25, %c0_26], %22 {strides = array<i32>} : memref<16x32xf32, #tpu.memory_space<vmem>>, vector<16x32xf32>,
      %cst_27 = arith.constant 0.000000e+00 : f32
      %24 = vector.broadcast %cst_27 : f32 to vector<16x32xf32>
      %c0_28 = arith.constant 0 : index
      %c0_29 = arith.constant 0 : index
      %25 = vector.load %arg14[%c0_28, %c0_29] : memref<16x32xf32, #tpu.memory_space<vmem>>, vector<16x32xf32>
      tpu.vector_store %arg14[%c0_28, %c0_29], %24 {strides = array<i32>} : memref<16x32xf32, #tpu.memory_space<vmem>>, vector<16x32xf32>,
      %cst_30 = arith.constant 0.000000e+00 : f32
      %26 = vector.broadcast %cst_30 : f32 to vector<16x32xf32>
      %c0_31 = arith.constant 0 : index
      %c0_32 = arith.constant 0 : index
      %27 = vector.load %arg15[%c0_31, %c0_32] : memref<16x32xf32, #tpu.memory_space<vmem>>, vector<16x32xf32>
      tpu.vector_store %arg15[%c0_31, %c0_32], %26 {strides = array<i32>} : memref<16x32xf32, #tpu.memory_space<vmem>>, vector<16x32xf32>,
    } else {
    }
    %c0 = arith.constant 0 : index
    %c0_1 = arith.constant 0 : index
    %3 = vector.load %arg3[%c0, %c0_1] : memref<16x32xbf16, #tpu.memory_space<vmem>>, vector<16x32xbf16>
    %c0_2 = arith.constant 0 : index
    %c0_3 = arith.constant 0 : index
    %4 = vector.load %arg13[%c0_2, %c0_3] : memref<16x32xf32, #tpu.memory_space<vmem>>, vector<16x32xf32>
    %c0_4 = arith.constant 0 : index
    %c0_5 = arith.constant 0 : index
    %5 = vector.load %arg4[%c0_4, %c0_5] : memref<32x32xbf16, #tpu.memory_space<vmem>>, vector<32x32xbf16>
    %cst = arith.constant dense<0.000000e+00> : vector<16x32xf32>
    %6 = tpu.matmul %3, %5, %cst {dimension_numbers = #tpu.dot_dimension_numbers<[1], [1], [0], [0], [0, 0, 1, 0], [], []>} : vector<16x32xbf16>, vector<32x32xbf16>, vector<16x32xf32> -> vector<16x32xf32>
    %7 = arith.addf %4, %6 : vector<16x32xf32>
    %c0_6 = arith.constant 0 : index
    %c0_7 = arith.constant 0 : index
    %8 = vector.load %arg13[%c0_6, %c0_7] : memref<16x32xf32, #tpu.memory_space<vmem>>, vector<16x32xf32>
    tpu.vector_store %arg13[%c0_6, %c0_7], %7 {strides = array<i32>} : memref<16x32xf32, #tpu.memory_space<vmem>>, vector<16x32xf32>,
    %c0_8 = arith.constant 0 : index
    %c0_9 = arith.constant 0 : index
    %9 = vector.load %arg14[%c0_8, %c0_9] : memref<16x32xf32, #tpu.memory_space<vmem>>, vector<16x32xf32>
    %c0_10 = arith.constant 0 : index
    %c0_11 = arith.constant 0 : index
    %10 = vector.load %arg5[%c0_10, %c0_11] : memref<32x32xbf16, #tpu.memory_space<vmem>>, vector<32x32xbf16>
    %cst_12 = arith.constant dense<0.000000e+00> : vector<16x32xf32>
    %11 = tpu.matmul %3, %10, %cst_12 {dimension_numbers = #tpu.dot_dimension_numbers<[1], [1], [0], [0], [0, 0, 1, 0], [], []>} : vector<16x32xbf16>, vector<32x32xbf16>, vector<16x32xf32> -> vector<16x32xf32>
    %12 = arith.addf %9, %11 : vector<16x32xf32>
    %c0_13 = arith.constant 0 : index
    %c0_14 = arith.constant 0 : index
    %13 = vector.load %arg14[%c0_13, %c0_14] : memref<16x32xf32, #tpu.memory_space<vmem>>, vector<16x32xf32>
    tpu.vector_store %arg14[%c0_13, %c0_14], %12 {strides = array<i32>} : memref<16x32xf32, #tpu.memory_space<vmem>>, vector<16x32xf32>,
    %c0_15 = arith.constant 0 : index
    %c0_16 = arith.constant 0 : index
    %14 = vector.load %arg15[%c0_15, %c0_16] : memref<16x32xf32, #tpu.memory_space<vmem>>, vector<16x32xf32>
    %c0_17 = arith.constant 0 : index
    %c0_18 = arith.constant 0 : index
    %15 = vector.load %arg6[%c0_17, %c0_18] : memref<32x32xbf16, #tpu.memory_space<vmem>>, vector<32x32xbf16>
    %cst_19 = arith.constant dense<0.000000e+00> : vector<16x32xf32>
    %16 = tpu.matmul %3, %15, %cst_19 {dimension_numbers = #tpu.dot_dimension_numbers<[1], [1], [0], [0], [0, 0, 1, 0], [], []>} : vector<16x32xbf16>, vector<32x32xbf16>, vector<16x32xf32> -> vector<16x32xf32>
    %17 = arith.addf %14, %16 : vector<16x32xf32>
    %c0_20 = arith.constant 0 : index
    %c0_21 = arith.constant 0 : index
    %18 = vector.load %arg15[%c0_20, %c0_21] : memref<16x32xf32, #tpu.memory_space<vmem>>, vector<16x32xf32>
    tpu.vector_store %arg15[%c0_20, %c0_21], %17 {strides = array<i32>} : memref<16x32xf32, #tpu.memory_space<vmem>>, vector<16x32xf32>,
    %c0_i32_22 = arith.constant 0 : i32
    %19 = arith.cmpi eq, %arg2, %c0_i32_22 : i32
    %20 = arith.extui %19 : i1 to i32
    %c0_i32_23 = arith.constant 0 : i32
    %21 = arith.cmpi ne, %20, %c0_i32_23 : i32
    scf.if %21 {
      %c0_24 = arith.constant 0 : index
      %c0_25 = arith.constant 0 : index
      %22 = vector.load %arg13[%c0_24, %c0_25] : memref<16x32xf32, #tpu.memory_space<vmem>>, vector<16x32xf32>
      %c0_26 = arith.constant 0 : index
      %c0_27 = arith.constant 0 : index
      %23 = vector.load %arg7[%c0_26, %c0_27] : memref<1x32xf32, #tpu.memory_space<vmem>>, vector<1x32xf32>
      %24 = vector.broadcast %23 : vector<1x32xf32> to vector<16x32xf32>
      %25 = arith.addf %22, %24 : vector<16x32xf32>
      %26 = arith.truncf %25 : vector<16x32xf32> to vector<16x32xbf16>
      %c0_28 = arith.constant 0 : index
      %c0_29 = arith.constant 0 : index
      %27 = vector.load %arg10[%c0_28, %c0_29] : memref<16x32xbf16, #tpu.memory_space<vmem>>, vector<16x32xbf16>
      tpu.vector_store %arg10[%c0_28, %c0_29], %26 {strides = array<i32>} : memref<16x32xbf16, #tpu.memory_space<vmem>>, vector<16x32xbf16>,
      %c0_30 = arith.constant 0 : index
      %c0_31 = arith.constant 0 : index
      %28 = vector.load %arg14[%c0_30, %c0_31] : memref<16x32xf32, #tpu.memory_space<vmem>>, vector<16x32xf32>
      %c0_32 = arith.constant 0 : index
      %c0_33 = arith.constant 0 : index
      %29 = vector.load %arg8[%c0_32, %c0_33] : memref<1x32xf32, #tpu.memory_space<vmem>>, vector<1x32xf32>
      %30 = vector.broadcast %29 : vector<1x32xf32> to vector<16x32xf32>
      %31 = arith.addf %28, %30 : vector<16x32xf32>
      %32 = arith.truncf %31 : vector<16x32xf32> to vector<16x32xbf16>
      %c0_34 = arith.constant 0 : index
      %c0_35 = arith.constant 0 : index
      %33 = vector.load %arg11[%c0_34, %c0_35] : memref<16x32xbf16, #tpu.memory_space<vmem>>, vector<16x32xbf16>
      tpu.vector_store %arg11[%c0_34, %c0_35], %32 {strides = array<i32>} : memref<16x32xbf16, #tpu.memory_space<vmem>>, vector<16x32xbf16>,
      %c0_36 = arith.constant 0 : index
      %c0_37 = arith.constant 0 : index
      %34 = vector.load %arg15[%c0_36, %c0_37] : memref<16x32xf32, #tpu.memory_space<vmem>>, vector<16x32xf32>
      %c0_38 = arith.constant 0 : index
      %c0_39 = arith.constant 0 : index
      %35 = vector.load %arg9[%c0_38, %c0_39] : memref<1x32xf32, #tpu.memory_space<vmem>>, vector<1x32xf32>
      %36 = vector.broadcast %35 : vector<1x32xf32> to vector<16x32xf32>
      %37 = arith.addf %34, %36 : vector<16x32xf32>
      %38 = arith.truncf %37 : vector<16x32xf32> to vector<16x32xbf16>
      %c0_40 = arith.constant 0 : index
      %c0_41 = arith.constant 0 : index
      %39 = vector.load %arg12[%c0_40, %c0_41] : memref<16x32xbf16, #tpu.memory_space<vmem>>, vector<16x32xbf16>
      tpu.vector_store %arg12[%c0_40, %c0_41], %38 {strides = array<i32>} : memref<16x32xbf16, #tpu.memory_space<vmem>>, vector<16x32xbf16>,
    } else {
    }
    return
  }
  func.func @transform_0(%arg0: i32, %arg1: i32, %arg2: i32) -> (i32, i32) {
    %c0_i32 = arith.constant 0 : i32
    return %arg0, %arg2 : i32, i32
  }
  func.func @transform_1(%arg0: i32, %arg1: i32, %arg2: i32) -> (i32, i32) {
    %c0_i32 = arith.constant 0 : i32
    return %arg1, %arg2 : i32, i32
  }
  func.func @transform_2(%arg0: i32, %arg1: i32, %arg2: i32) -> (i32, i32) {
    %c0_i32 = arith.constant 0 : i32
    return %arg1, %arg2 : i32, i32
  }
  func.func @transform_3(%arg0: i32, %arg1: i32, %arg2: i32) -> (i32, i32) {
    %c0_i32 = arith.constant 0 : i32
    return %arg1, %arg2 : i32, i32
  }
  func.func @transform_4(%arg0: i32, %arg1: i32, %arg2: i32) -> (i32, i32) {
    %c0_i32 = arith.constant 0 : i32
    %c0_i32_0 = arith.constant 0 : i32
    return %c0_i32, %arg1 : i32, i32
  }
  func.func @transform_5(%arg0: i32, %arg1: i32, %arg2: i32) -> (i32, i32) {
    %c0_i32 = arith.constant 0 : i32
    %c0_i32_0 = arith.constant 0 : i32
    return %c0_i32, %arg1 : i32, i32
  }
  func.func @transform_6(%arg0: i32, %arg1: i32, %arg2: i32) -> (i32, i32) {
    %c0_i32 = arith.constant 0 : i32
    %c0_i32_0 = arith.constant 0 : i32
    return %c0_i32, %arg1 : i32, i32
  }
  func.func @transform_7(%arg0: i32, %arg1: i32, %arg2: i32) -> (i32, i32) {
    %c0_i32 = arith.constant 0 : i32
    return %arg0, %arg1 : i32, i32
  }
  func.func @transform_8(%arg0: i32, %arg1: i32, %arg2: i32) -> (i32, i32) {
    %c0_i32 = arith.constant 0 : i32
    return %arg0, %arg1 : i32, i32
  }
  func.func @transform_9(%arg0: i32, %arg1: i32, %arg2: i32) -> (i32, i32) {
    %c0_i32 = arith.constant 0 : i32
    return %arg0, %arg1 : i32, i32
  }
}

</mosaic_0001>

<llo_original>
// kernel: tpu_custom_call.1
$region0: #{tpu_custom_call.1}
  #allocation0 [shape = 'u32[]', space=smem, size = 0x4, offset = 0x4, fixed_abs, tag = 'smem constant byte address 0x4 - core index']
  #allocation1 [shape = 'u32[144,128]{1,0:T(1,128)}', space=vmem, size = 0x12000, scoped, tag = 'internal scratch']
  #allocation2 [shape = 'f32[16,32]{1,0:T(8,128)}', space=vmem, size = 0x2000, scoped, tag = 'scratch operand']
  #allocation3 [shape = 'f32[16,32]{1,0:T(8,128)}', space=vmem, size = 0x2000, scoped, tag = 'scratch operand']
  #allocation4 [shape = 'f32[16,32]{1,0:T(8,128)}', space=vmem, size = 0x2000, scoped, tag = 'scratch operand']
  %s0 = inlined_call_operand.hbm [shape: bf16[16,32], index: 0, kind: input, shape index: {}]
  %s1 = inlined_call_operand.hbm [shape: bf16[32,32], index: 1, kind: input, shape index: {}]
  %s2 = inlined_call_operand.hbm [shape: bf16[32,32], index: 2, kind: input, shape index: {}]
  %s3 = inlined_call_operand.hbm [shape: bf16[32,32], index: 3, kind: input, shape index: {}]
  %s4 = inlined_call_operand.vmem [shape: f32[1,32], index: 4, kind: input, shape index: {}]
  %s5 = inlined_call_operand.vmem [shape: f32[1,32], index: 5, kind: input, shape index: {}]
  %s6 = inlined_call_operand.vmem [shape: f32[1,32], index: 6, kind: input, shape index: {}]
  %s7 = inlined_call_operand.hbm [shape: bf16[16,32], index: 7, kind: output, shape index: {0}]
  %s8 = inlined_call_operand.hbm [shape: bf16[16,32], index: 8, kind: output, shape index: {1}]
  %s9 = inlined_call_operand.hbm [shape: bf16[16,32], index: 9, kind: output, shape index: {2}]
  %10 = xla_tuple %s7, %s8, %s9
  %s11 = sld [smem:[#allocation0]]
  $region78: #{tpu_custom_call.1} parent=0
    _
  %s13 = ssub.s32 1, %s11
  %s14 = scalar_select 0, %s13, %s11
  $region1: #{tpu_custom_call.1} parent=0
    #allocation5 [shape = 'u8[4096]{0}', space=vmem, size = 0x1000, scoped, tag = 'input window, operand 0, single buffered']
    #allocation6 [shape = 's32[1]{0}', space=sflag, size = 0x4, scoped, tag = 'scoped memory for tpu_custom_call.1']
    #allocation7 [shape = 's32[1]{0}', space=sflag, size = 0x4, scoped, tag = 'scoped memory for tpu_custom_call.1']
    #allocation8 [shape = 'u8[8192]{0}', space=vmem, size = 0x2000, scoped, tag = 'input window, operand 1, single buffered']
    #allocation9 [shape = 's32[1]{0}', space=sflag, size = 0x4, scoped, tag = 'scoped memory for tpu_custom_call.1']
    #allocation10 [shape = 'u8[8192]{0}', space=vmem, size = 0x2000, scoped, tag = 'input window, operand 2, single buffered']
    #allocation11 [shape = 'u8[8192]{0}', space=vmem, size = 0x2000, scoped, tag = 'input window, operand 3, single buffered']
    #allocation12 [shape = 's32[1]{0}', space=sflag, size = 0x4, scoped, tag = 'scoped memory for tpu_custom_call.1']
    #allocation13 [shape = 'u8[4096]{0}', space=vmem, size = 0x1000, scoped, tag = 'output window, operand 0, single buffered']
    #allocation14 [shape = 'u8[4096]{0}', space=vmem, size = 0x1000, scoped, tag = 'output window, operand 1, single buffered']
    #allocation15 [shape = 's32[1]{0}', space=sflag, size = 0x4, scoped, tag = 'scoped memory for tpu_custom_call.1']
    #allocation16 [shape = 'u8[4096]{0}', space=vmem, size = 0x1000, scoped, tag = 'output window, operand 2, single buffered']
    %15 = vsyncpa [#allocation6], 0
    %16 = vsyncpa [#allocation9], 0
    %17 = vsyncpa [#allocation12], 0
    %18 = vsyncpa [#allocation7], 0
    %19 = vsyncpa [#allocation15], 0
    // Predicated region
    $region2: #{tpu_custom_call.1} parent=1 // pred_check
      _
    $region3: #{tpu_custom_call.1} parent=1 // pred_check_branch
      %21 = sbr.rel (0) target = $region5
    $region4: #{tpu_custom_call.1} parent=1 // pred_region
      %s23 = ssub.s32 128, 128
      %24 = vsyncadd [#allocation6], %s23
      %s25 = sshll.u32 [#allocation5], 4
      %s26 = int_to_ptr.vmem [resolvable:$true] %s25
      %31 = dma.hbm_to_vmem [thread:$0]  %s0, 128, %s26, [#allocation6], 64, 64, 4
    $region5: #{tpu_custom_call.1} parent=1 // pred_fallthru
      _
    // Predicated region
    $region6: #{tpu_custom_call.1} parent=1 // pred_check
      _
    $region7: #{tpu_custom_call.1} parent=1 // pred_check_branch
      %33 = sbr.rel (0) target = $region9
    $region8: #{tpu_custom_call.1} parent=1 // pred_region
      %s35 = ssub.s32 256, 256
      %36 = vsyncadd [#allocation9], %s35
      %s37 = sshll.u32 [#allocation8], 4
      %s38 = int_to_ptr.vmem [resolvable:$true] %s37
      %43 = dma.hbm_to_vmem [thread:$0]  %s1, 256, %s38, [#allocation9], 64, 64, 4
    $region9: #{tpu_custom_call.1} parent=1 // pred_fallthru
      _
    // Predicated region
    $region10: #{tpu_custom_call.1} parent=1 // pred_check
      _
    $region11: #{tpu_custom_call.1} parent=1 // pred_check_branch
      %45 = sbr.rel (0) target = $region13
    $region12: #{tpu_custom_call.1} parent=1 // pred_region
      %s47 = ssub.s32 256, 256
      %48 = vsyncadd [#allocation9], %s47
      %s49 = sshll.u32 [#allocation10], 4
      %s50 = int_to_ptr.vmem [resolvable:$true] %s49
      %55 = dma.hbm_to_vmem [thread:$0]  %s2, 256, %s50, [#allocation9], 64, 64, 4
    $region13: #{tpu_custom_call.1} parent=1 // pred_fallthru
      _
    // Predicated region
    $region14: #{tpu_custom_call.1} parent=1 // pred_check
      _
    $region15: #{tpu_custom_call.1} parent=1 // pred_check_branch
      %57 = sbr.rel (0) target = $region17
    $region16: #{tpu_custom_call.1} parent=1 // pred_region
      %s59 = ssub.s32 256, 256
      %60 = vsyncadd [#allocation12], %s59
      %s61 = sshll.u32 [#allocation11], 4
      %s62 = int_to_ptr.vmem [resolvable:$true] %s61
      %67 = dma.hbm_to_vmem [thread:$0]  %s3, 256, %s62, [#allocation12], 64, 64, 4
    $region17: #{tpu_custom_call.1} parent=1 // pred_fallthru
      _
    // Predicated region
    $region18: #{tpu_custom_call.1} parent=1 // pred_check
      _
    $region19: #{tpu_custom_call.1} parent=1 // pred_check_branch
      %69 = sbr.rel (0) target = $region21
    $region20: #{tpu_custom_call.1} parent=1 // pred_region
      _
    $region21: #{tpu_custom_call.1} parent=1 // pred_fallthru
      _
    // Predicated region
    $region22: #{tpu_custom_call.1} parent=1 // pred_check
      _
    $region23: #{tpu_custom_call.1} parent=1 // pred_check_branch
      %71 = sbr.rel (0) target = $region25
    $region24: #{tpu_custom_call.1} parent=1 // pred_region
      _
    $region25: #{tpu_custom_call.1} parent=1 // pred_fallthru
      _
    // Predicated region
    $region26: #{tpu_custom_call.1} parent=1 // pred_check
      _
    $region27: #{tpu_custom_call.1} parent=1 // pred_check_branch
      %73 = sbr.rel (0) target = $region29
    $region28: #{tpu_custom_call.1} parent=1 // pred_region
      _
    $region29: #{tpu_custom_call.1} parent=1 // pred_fallthru
      _
    // Predicated region
    $region30: #{tpu_custom_call.1} parent=1 // pred_check
      _
    $region31: #{tpu_custom_call.1} parent=1 // pred_check_branch
      %75 = sbr.rel (0) target = $region33
    $region32: #{tpu_custom_call.1} parent=1 // pred_region
      %76 = dma.done [#allocation6], 128
    $region33: #{tpu_custom_call.1} parent=1 // pred_fallthru
      _
    // Predicated region
    $region34: #{tpu_custom_call.1} parent=1 // pred_check
      _
    $region35: #{tpu_custom_call.1} parent=1 // pred_check_branch
      %78 = sbr.rel (0) target = $region37
    $region36: #{tpu_custom_call.1} parent=1 // pred_region
      %79 = dma.done [#allocation9], 256
    $region37: #{tpu_custom_call.1} parent=1 // pred_fallthru
      _
    // Predicated region
    $region38: #{tpu_custom_call.1} parent=1 // pred_check
      _
    $region39: #{tpu_custom_call.1} parent=1 // pred_check_branch
      %81 = sbr.rel (0) target = $region41
    $region40: #{tpu_custom_call.1} parent=1 // pred_region
      %82 = dma.done [#allocation9], 256
    $region41: #{tpu_custom_call.1} parent=1 // pred_fallthru
      _
    // Predicated region
    $region42: #{tpu_custom_call.1} parent=1 // pred_check
      _
    $region43: #{tpu_custom_call.1} parent=1 // pred_check_branch
      %84 = sbr.rel (0) target = $region45
    $region44: #{tpu_custom_call.1} parent=1 // pred_region
      %85 = dma.done [#allocation12], 256
    $region45: #{tpu_custom_call.1} parent=1 // pred_fallthru
      _
    %p87 = scmp.eq.s32.totalorder 0, 0
    // Predicated region
    $region46: #{tpu_custom_call.1} parent=1 // pred_check
      %p88 = pneg %p87
    $region47: #{tpu_custom_call.1} parent=1 // pred_check_branch
      %90 = sbr.rel (%p88) target = $region49
    $region48: #{tpu_custom_call.1} parent=1 // pred_region
      %vm91 = vcmask 261120
      %92 = vst.msk [vmem:[#allocation2] sm:$0xff] %vm91, 0.0
      %93 = vst.msk [vmem:[#allocation2 + $0x8] sm:$0xff] %vm91, 0.0
      %94 = vst.msk [vmem:[#allocation3] sm:$0xff] %vm91, 0.0
      %95 = vst.msk [vmem:[#allocation3 + $0x8] sm:$0xff] %vm91, 0.0
      %96 = vst.msk [vmem:[#allocation4] sm:$0xff] %vm91, 0.0
      %97 = vst.msk [vmem:[#allocation4 + $0x8] sm:$0xff] %vm91, 0.0
    $region49: #{tpu_custom_call.1} parent=1 // pred_fallthru
      _
    %v98 = vld [vmem:[#allocation5] sm:$0xf]
    %v99 = vld [vmem:[#allocation5 + $0x4] sm:$0xf]
    %v100 = vld [vmem:[#allocation2] sm:$0xff]
    %v101 = vld [vmem:[#allocation2 + $0x8] sm:$0xff]
    %v102 = vld [vmem:[#allocation8] sm:$0xf]
    %v103 = vld [vmem:[#allocation8 + $0x4] sm:$0xf]
    %v104 = vld [vmem:[#allocation8 + $0x8] sm:$0xf]
    %v105 = vld [vmem:[#allocation8 + $0xc] sm:$0xf]
    %v108 = vunpack.c.l.b16 %v98
    %v109 = vunpack.c.l.b16 %v99
    %v110 = vpack.c.b16 %v109, %v108
    %v115 = vunpack.c.l.b16 %v102
    %v116 = vunpack.c.l.b16 %v103
    %v117 = vunpack.c.l.b16 %v104
    %v118 = vunpack.c.l.b16 %v105
    %v119 = vpack.c.b16 %v116, %v115
    %v120 = vpack.c.b16 %v118, %v117
    %vm121 = vcmask 261120
    %v123 = vsel %vm121, %v110, 0
    %v126 = vsel %vm121, %v119, 0
    %v129 = vsel %vm121, %v120, 0
    %131 = vmatprep.subr.bf16.mxu0 0
    %132 = vmatpush1.bf16.xpose.msra.mxu0 %v126
    %133 = vmatprep.subr.bf16.mxu0 0
    %134 = vmatpush1.bf16.xpose.msra.mxu0 %v129
    %135 = vmatprep.subr.bf16.mxu0 0
    %136 = vmatpush1.bf16.xpose.msra.mxu0 0
    %137 = vmatprep.subr.bf16.mxu0 0
    %138 = vmatpush1.bf16.xpose.msra.mxu0 0
    %139 = vmatprep.subr.bf16.mxu0 0
    %140 = vmatpush1.bf16.xpose.msra.mxu0 0
    %141 = vmatprep.subr.bf16.mxu0 0
    %142 = vmatpush1.bf16.xpose.msra.mxu0 0
    %143 = vmatprep.subr.bf16.mxu0 0
    %144 = vmatpush1.bf16.xpose.msra.mxu0 0
    %145 = vmatprep.subr.bf16.mxu0 0
    %146 = vmatpush1.bf16.xpose.msra.mxu0 0
    %147 = vmatprep.subr.bf16.mxu0 0
    %148 = vmatpush1.bf16.xpose.msra.mxu0 0
    %149 = vmatprep.subr.bf16.mxu0 0
    %150 = vmatpush1.bf16.xpose.msra.mxu0 0
    %151 = vmatprep.subr.bf16.mxu0 0
    %152 = vmatpush1.bf16.xpose.msra.mxu0 0
    %153 = vmatprep.subr.bf16.mxu0 0
    %154 = vmatpush1.bf16.xpose.msra.mxu0 0
    %155 = vmatprep.subr.bf16.mxu0 0
    %156 = vmatpush1.bf16.xpose.msra.mxu0 0
    %157 = vmatprep.subr.bf16.mxu0 0
    %158 = vmatpush1.bf16.xpose.msra.mxu0 0
    %159 = vmatprep.subr.bf16.mxu0 0
    %160 = vmatpush1.bf16.xpose.msra.mxu0 0
    %161 = vmatprep.subr.bf16.mxu0 0
    %162 = vmatpush1.bf16.xpose.msra.mxu0 0
    %163 = vmatprep.mubr.bf16.mxu0 0
    %164 = vmatmul.mubr.bf16.gmra.mrb[0].mxu0 %v123
    %v165 = vpop.f32.mrb[0].mxu0
    %v166 = vadd.f32 0.0, %v165
    %v167 = vpop.f32.mrb[0].mxu0
    %v168 = vpop.f32.mrb[0].mxu0
    %v169 = vadd.f32 0.0, %v168
    %v170 = vpop.f32.mrb[0].mxu0
    %171 = vdwg.mxu0
    %v172 = vadd.f32 %v100, %v166
    %v173 = vadd.f32 %v101, %v169
    %174 = vst.msk [vmem:[#allocation2] sm:$0xff] %vm121, %v172
    %175 = vst.msk [vmem:[#allocation2 + $0x8] sm:$0xff] %vm121, %v173
    %v176 = vld [vmem:[#allocation3] sm:$0xff]
    %v177 = vld [vmem:[#allocation3 + $0x8] sm:$0xff]
    %v178 = vld [vmem:[#allocation10] sm:$0xf]
    %v179 = vld [vmem:[#allocation10 + $0x4] sm:$0xf]
    %v180 = vld [vmem:[#allocation10 + $0x8] sm:$0xf]
    %v181 = vld [vmem:[#allocation10 + $0xc] sm:$0xf]
    %v186 = vunpack.c.l.b16 %v178
    %v187 = vunpack.c.l.b16 %v179
    %v188 = vunpack.c.l.b16 %v180
    %v189 = vunpack.c.l.b16 %v181
    %v190 = vpack.c.b16 %v187, %v186
    %v191 = vpack.c.b16 %v189, %v188
    %v193 = vsel %vm121, %v190, 0
    %v196 = vsel %vm121, %v191, 0
    %198 = vmatprep.subr.bf16.mxu0 0
    %199 = vmatpush1.bf16.xpose.msra.mxu0 %v193
    %200 = vmatprep.subr.bf16.mxu0 0
    %201 = vmatpush1.bf16.xpose.msra.mxu0 %v196
    %202 = vmatprep.subr.bf16.mxu0 0
    %203 = vmatpush1.bf16.xpose.msra.mxu0 0
    %204 = vmatprep.subr.bf16.mxu0 0
    %205 = vmatpush1.bf16.xpose.msra.mxu0 0
    %206 = vmatprep.subr.bf16.mxu0 0
    %207 = vmatpush1.bf16.xpose.msra.mxu0 0
    %208 = vmatprep.subr.bf16.mxu0 0
    %209 = vmatpush1.bf16.xpose.msra.mxu0 0
    %210 = vmatprep.subr.bf16.mxu0 0
    %211 = vmatpush1.bf16.xpose.msra.mxu0 0
    %212 = vmatprep.subr.bf16.mxu0 0
    %213 = vmatpush1.bf16.xpose.msra.mxu0 0
    %214 = vmatprep.subr.bf16.mxu0 0
    %215 = vmatpush1.bf16.xpose.msra.mxu0 0
    %216 = vmatprep.subr.bf16.mxu0 0
    %217 = vmatpush1.bf16.xpose.msra.mxu0 0
    %218 = vmatprep.subr.bf16.mxu0 0
    %219 = vmatpush1.bf16.xpose.msra.mxu0 0
    %220 = vmatprep.subr.bf16.mxu0 0
    %221 = vmatpush1.bf16.xpose.msra.mxu0 0
    %222 = vmatprep.subr.bf16.mxu0 0
    %223 = vmatpush1.bf16.xpose.msra.mxu0 0
    %224 = vmatprep.subr.bf16.mxu0 0
    %225 = vmatpush1.bf16.xpose.msra.mxu0 0
    %226 = vmatprep.subr.bf16.mxu0 0
    %227 = vmatpush1.bf16.xpose.msra.mxu0 0
    %228 = vmatprep.subr.bf16.mxu0 0
    %229 = vmatpush1.bf16.xpose.msra.mxu0 0
    %230 = vmatprep.mubr.bf16.mxu0 0
    %231 = vmatmul.mubr.bf16.gmra.mrb[0].mxu0 %v123
    %v232 = vpop.f32.mrb[0].mxu0
    %v233 = vadd.f32 0.0, %v232
    %v234 = vpop.f32.mrb[0].mxu0
    %v235 = vpop.f32.mrb[0].mxu0
    %v236 = vadd.f32 0.0, %v235
    %v237 = vpop.f32.mrb[0].mxu0
    %238 = vdwg.mxu0
    %v239 = vadd.f32 %v176, %v233
    %v240 = vadd.f32 %v177, %v236
    %241 = vst.msk [vmem:[#allocation3] sm:$0xff] %vm121, %v239
    %242 = vst.msk [vmem:[#allocation3 + $0x8] sm:$0xff] %vm121, %v240
    %v243 = vld [vmem:[#allocation4] sm:$0xff]
    %v244 = vld [vmem:[#allocation4 + $0x8] sm:$0xff]
    %v245 = vld [vmem:[#allocation11] sm:$0xf]
    %v246 = vld [vmem:[#allocation11 + $0x4] sm:$0xf]
    %v247 = vld [vmem:[#allocation11 + $0x8] sm:$0xf]
    %v248 = vld [vmem:[#allocation11 + $0xc] sm:$0xf]
    %v253 = vunpack.c.l.b16 %v245
    %v254 = vunpack.c.l.b16 %v246
    %v255 = vunpack.c.l.b16 %v247
    %v256 = vunpack.c.l.b16 %v248
    %v257 = vpack.c.b16 %v254, %v253
    %v258 = vpack.c.b16 %v256, %v255
    %v260 = vsel %vm121, %v257, 0
    %v263 = vsel %vm121, %v258, 0
    %265 = vmatprep.subr.bf16.mxu0 0
    %266 = vmatpush1.bf16.xpose.msra.mxu0 %v260
    %267 = vmatprep.subr.bf16.mxu0 0
    %268 = vmatpush1.bf16.xpose.msra.mxu0 %v263
    %269 = vmatprep.subr.bf16.mxu0 0
    %270 = vmatpush1.bf16.xpose.msra.mxu0 0
    %271 = vmatprep.subr.bf16.mxu0 0
    %272 = vmatpush1.bf16.xpose.msra.mxu0 0
    %273 = vmatprep.subr.bf16.mxu0 0
    %274 = vmatpush1.bf16.xpose.msra.mxu0 0
    %275 = vmatprep.subr.bf16.mxu0 0
    %276 = vmatpush1.bf16.xpose.msra.mxu0 0
    %277 = vmatprep.subr.bf16.mxu0 0
    %278 = vmatpush1.bf16.xpose.msra.mxu0 0
    %279 = vmatprep.subr.bf16.mxu0 0
    %280 = vmatpush1.bf16.xpose.msra.mxu0 0
    %281 = vmatprep.subr.bf16.mxu0 0
    %282 = vmatpush1.bf16.xpose.msra.mxu0 0
    %283 = vmatprep.subr.bf16.mxu0 0
    %284 = vmatpush1.bf16.xpose.msra.mxu0 0
    %285 = vmatprep.subr.bf16.mxu0 0
    %286 = vmatpush1.bf16.xpose.msra.mxu0 0
    %287 = vmatprep.subr.bf16.mxu0 0
    %288 = vmatpush1.bf16.xpose.msra.mxu0 0
    %289 = vmatprep.subr.bf16.mxu0 0
    %290 = vmatpush1.bf16.xpose.msra.mxu0 0
    %291 = vmatprep.subr.bf16.mxu0 0
    %292 = vmatpush1.bf16.xpose.msra.mxu0 0
    %293 = vmatprep.subr.bf16.mxu0 0
    %294 = vmatpush1.bf16.xpose.msra.mxu0 0
    %295 = vmatprep.subr.bf16.mxu0 0
    %296 = vmatpush1.bf16.xpose.msra.mxu0 0
    %297 = vmatprep.mubr.bf16.mxu0 0
    %298 = vmatmul.mubr.bf16.gmra.mrb[0].mxu0 %v123
    %v299 = vpop.f32.mrb[0].mxu0
    %v300 = vadd.f32 0.0, %v299
    %v301 = vpop.f32.mrb[0].mxu0
    %v302 = vpop.f32.mrb[0].mxu0
    %v303 = vadd.f32 0.0, %v302
    %v304 = vpop.f32.mrb[0].mxu0
    %305 = vdwg.mxu0
    %v306 = vadd.f32 %v243, %v300
    %v307 = vadd.f32 %v244, %v303
    %308 = vst.msk [vmem:[#allocation4] sm:$0xff] %vm121, %v306
    %309 = vst.msk [vmem:[#allocation4 + $0x8] sm:$0xff] %vm121, %v307
    // Predicated region
    $region50: #{tpu_custom_call.1} parent=1 // pred_check
      %p310 = pneg %p87
    $region51: #{tpu_custom_call.1} parent=1 // pred_check_branch
      %312 = sbr.rel (%p310) target = $region53
    $region52: #{tpu_custom_call.1} parent=1 // pred_region
      %v313 = vld [vmem:[#allocation2] sm:$0xff]
      %v314 = vld [vmem:[#allocation2 + $0x8] sm:$0xff]
      %v315 = vld [vmem:[%s4] sm:$0x1]
      %v317 = vlaneseq
      %v318 = vshrl.u32 %v317, 7
      %v319 = vsub.s32 0, %v318
      %v320 = vrot.slane %v315, %v319
      %v322 = vadd.f32 %v313, %v320
      %v323 = vadd.f32 %v314, %v320
      %v324 = vpack.c.bf16 %v323, %v322
      %v326 = vunpack.c.l.b16 %v324
      %v327 = vunpack.c.h.b16 %v324
      %v328 = vpack.c.b16 %v326, %v326
      %v329 = vpack.c.b16 %v327, %v327
      %vm332 = vcmask 257024
      %333 = vst.msk [vmem:[#allocation13] sm:$0xf] %vm332, %v328
      %334 = vst.msk [vmem:[#allocation13 + $0x4] sm:$0xf] %vm332, %v329
      %v335 = vld [vmem:[#allocation3] sm:$0xff]
      %v336 = vld [vmem:[#allocation3 + $0x8] sm:$0xff]
      %v337 = vld [vmem:[%s5] sm:$0x1]
      %v339 = vlaneseq
      %v340 = vshrl.u32 %v339, 7
      %v341 = vsub.s32 0, %v340
      %v342 = vrot.slane %v337, %v341
      %v344 = vadd.f32 %v335, %v342
      %v345 = vadd.f32 %v336, %v342
      %v346 = vpack.c.bf16 %v345, %v344
      %v348 = vunpack.c.l.b16 %v346
      %v349 = vunpack.c.h.b16 %v346
      %v350 = vpack.c.b16 %v348, %v348
      %v351 = vpack.c.b16 %v349, %v349
      %354 = vst.msk [vmem:[#allocation14] sm:$0xf] %vm332, %v350
      %355 = vst.msk [vmem:[#allocation14 + $0x4] sm:$0xf] %vm332, %v351
      %v356 = vld [vmem:[#allocation4] sm:$0xff]
      %v357 = vld [vmem:[#allocation4 + $0x8] sm:$0xff]
      %v358 = vld [vmem:[%s6] sm:$0x1]
      %v360 = vlaneseq
      %v361 = vshrl.u32 %v360, 7
      %v362 = vsub.s32 0, %v361
      %v363 = vrot.slane %v358, %v362
      %v365 = vadd.f32 %v356, %v363
      %v366 = vadd.f32 %v357, %v363
      %v367 = vpack.c.bf16 %v366, %v365
      %v369 = vunpack.c.l.b16 %v367
      %v370 = vunpack.c.h.b16 %v367
      %v371 = vpack.c.b16 %v369, %v369
      %v372 = vpack.c.b16 %v370, %v370
      %375 = vst.msk [vmem:[#allocation16] sm:$0xf] %vm332, %v371
      %376 = vst.msk [vmem:[#allocation16 + $0x4] sm:$0xf] %vm332, %v372
    $region53: #{tpu_custom_call.1} parent=1 // pred_fallthru
      _
    // Predicated region
    $region54: #{tpu_custom_call.1} parent=1 // pred_check
      _
    $region55: #{tpu_custom_call.1} parent=1 // pred_check_branch
      %378 = sbr.rel (0) target = $region57
    $region56: #{tpu_custom_call.1} parent=1 // pred_region
      %s380 = ssub.s32 128, 128
      %381 = vsyncadd [#allocation7], %s380
      %s382 = sshll.u32 [#allocation13], 4
      %s383 = int_to_ptr.vmem [resolvable:$true] %s382
      %388 = dma.vmem_to_hbm [thread:$0]  %s383, 128, %s7, [#allocation7], 64, 64, 4
    $region57: #{tpu_custom_call.1} parent=1 // pred_fallthru
      _
    // Predicated region
    $region58: #{tpu_custom_call.1} parent=1 // pred_check
      _
    $region59: #{tpu_custom_call.1} parent=1 // pred_check_branch
      %390 = sbr.rel (0) target = $region61
    $region60: #{tpu_custom_call.1} parent=1 // pred_region
      %s392 = ssub.s32 128, 128
      %393 = vsyncadd [#allocation15], %s392
      %s394 = sshll.u32 [#allocation14], 4
      %s395 = int_to_ptr.vmem [resolvable:$true] %s394
      %400 = dma.vmem_to_hbm [thread:$0]  %s395, 128, %s8, [#allocation15], 64, 64, 4
    $region61: #{tpu_custom_call.1} parent=1 // pred_fallthru
      _
    // Predicated region
    $region62: #{tpu_custom_call.1} parent=1 // pred_check
      _
    $region63: #{tpu_custom_call.1} parent=1 // pred_check_branch
      %402 = sbr.rel (0) target = $region65
    $region64: #{tpu_custom_call.1} parent=1 // pred_region
      %s404 = ssub.s32 128, 128
      %405 = vsyncadd [#allocation15], %s404
      %s406 = sshll.u32 [#allocation16], 4
      %s407 = int_to_ptr.vmem [resolvable:$true] %s406
      %412 = dma.vmem_to_hbm [thread:$0]  %s407, 128, %s9, [#allocation15], 64, 64, 4
    $region65: #{tpu_custom_call.1} parent=1 // pred_fallthru
      _
    // Predicated region
    $region66: #{tpu_custom_call.1} parent=1 // pred_check
      _
    $region67: #{tpu_custom_call.1} parent=1 // pred_check_branch
      %414 = sbr.rel (0) target = $region69
    $region68: #{tpu_custom_call.1} parent=1 // pred_region
      %415 = dma.done [#allocation7], 128
    $region69: #{tpu_custom_call.1} parent=1 // pred_fallthru
      _
    // Predicated region
    $region70: #{tpu_custom_call.1} parent=1 // pred_check
      _
    $region71: #{tpu_custom_call.1} parent=1 // pred_check_branch
      %417 = sbr.rel (0) target = $region73
    $region72: #{tpu_custom_call.1} parent=1 // pred_region
      %418 = dma.done [#allocation15], 128
    $region73: #{tpu_custom_call.1} parent=1 // pred_fallthru
      _
    // Predicated region
    $region74: #{tpu_custom_call.1} parent=1 // pred_check
      _
    $region75: #{tpu_custom_call.1} parent=1 // pred_check_branch
      %420 = sbr.rel (0) target = $region77
    $region76: #{tpu_custom_call.1} parent=1 // pred_region
      %421 = dma.done [#allocation15], 128
    $region77: #{tpu_custom_call.1} parent=1 // pred_fallthru
      _
    %422 = vsyncpa [#allocation6], 1
    %423 = vsyncpa [#allocation9], 1
    %424 = vsyncpa [#allocation12], 1
    %425 = vsyncpa [#allocation7], 1
    %426 = vsyncpa [#allocation15], 1

</llo_original>
